<compile_context>
chip_gen: v5e
topology: v5e:2x2
jax: 0.10.0
libtpu: 0.0.40
codegen_flags: <defaults>
</compile_context>

<pallas_src>
import numpy as np
import jax
import jax.numpy as jnp
from jax.experimental import pallas as pl
from jax.experimental.pallas import tpu as pltpu

IMAGE_SIZE = 16
NUM_PATCHES = 4
NUM_CLASSES = 4
BASE_FEATURES = 32                                    # synthetic stand-in for base_features
PATCH_SIZE = int(IMAGE_SIZE // np.sqrt(NUM_PATCHES))  # 8
HW = PATCH_SIZE * PATCH_SIZE                          # 64
C_IN = 3
KPAD = 128                                            # lane-dense padded class dimension
BLOCK_B = 256                                         # batch rows per grid step
F_CHUNK = 16                                          # feature chunk (bounds VMEM temporaries)
N_FCHUNKS = BASE_FEATURES // F_CHUNK


def _extract_patches_cl(x):
    """Faithful replica of inputs.unfold(2,ps,ps).unfold(3,ps,ps).contiguous()
    .view(-1,3,ps,ps) (PyTorch channel-mixing quirk kept), laid out channels-leading
    and lane-dense as (3, B, P*HW) for the kernel."""
    B, C, H, W = x.shape
    ps = PATCH_SIZE
    gh, gw = H // ps, W // ps
    p = x.reshape(B, C, gh, ps, gw, ps).transpose(0, 1, 2, 4, 3, 5)   # (B,C,gh,gw,ps,ps)
    # row-major regroup of (c,gh,gw) planes into groups of 3 == torch .view(-1,3,ps,ps)
    p = p.reshape(B, NUM_PATCHES, C_IN, HW)                            # (B, P, c', HW)
    p = p.transpose(2, 0, 1, 3).reshape(C_IN, B, NUM_PATCHES * HW)     # (3, B, P*HW)
    return p


def patchnet_kernel(x_ref, w1_ref, b1_ref, wl_ref, bl_ref, out_ref):
    # x_ref:  (3, TB, P*HW)  bf16 channel-mixed patches, n = p*HW + hw (lane-dense)
    # w1_ref: (3, F, 1)      f32 synthetic backbone 1x1-conv weight (per-channel column)
    # b1_ref: (F, 1)         f32 conv bias (column vector)
    # wl_ref: (P*F, KPAD)    f32 classifier weight (wl.T), classes zero-padded 4 -> 128
    # bl_ref: (1, KPAD)      f32 classifier bias, padded
    # out_ref:(TB, KPAD)     f32 lane-dense logits slab

    # hoisted once per grid step: bf16 -> f32 channel slabs, each (TB, 256) lane-dense
    x0 = x_ref[0].astype(jnp.float32)
    x1 = x_ref[1].astype(jnp.float32)
    x2 = x_ref[2].astype(jnp.float32)
    w1 = w1_ref[...]                                   # (3, F, 1)
    b1 = b1_ref[...]                                   # (F, 1)

    inv_hw = jnp.float32(1.0 / HW)
    pieces = [[None] * N_FCHUNKS for _ in range(NUM_PATCHES)]
    for ci in range(N_FCHUNKS):                        # F-chunks bound f32 temporaries in VMEM
        f0, f1 = ci * F_CHUNK, (ci + 1) * F_CHUNK
        # depth-3 1x1 conv as VPU FMAs over the full 256-lane slab (a K=3 MXU matmul
        # would be ~1% utilized); bias + ReLU fused, all math f32.
        s = (x0[:, None, :] * w1[0, f0:f1][None]
             + x1[:, None, :] * w1[1, f0:f1][None]
             + x2[:, None, :] * w1[2, f0:f1][None])                   # (TB, FC, 256)
        s = jnp.maximum(s + b1[f0:f1][None], 0.0)
        for p in range(NUM_PATCHES):                                   # per-patch global avg pool
            pieces[p][ci] = jnp.sum(s[:, :, p * HW:(p + 1) * HW],
                                    axis=-1) * inv_hw                  # (TB, FC)

    # lane-dense (TB, P*F = 128) feats, column order p*F + f (torch flatten order)
    feats = jnp.concatenate(
        [pieces[p][ci] for p in range(NUM_PATCHES) for ci in range(N_FCHUNKS)],
        axis=1)

    # single K=128 MXU head dot with f32 accumulation
    out_ref[...] = (jnp.dot(feats, wl_ref[...], preferred_element_type=jnp.float32)
                    + bl_ref[...])


def _pick_block_b(B, block_b):
    if B > block_b:
        return block_b                 # >= 2 grid steps automatically
    if B <= 16:
        return B                       # single tiny tile (block == full batch dim)
    # split into >= 2 tiles so the "parallel" batch axis can use both v7x TensorCores
    half = -(-B // 2)
    return min(block_b, -(-half // 16) * 16)


def patchnet_forward(x, params, block_b=BLOCK_B):
    w1, b1, wl, bl = params
    B = x.shape[0]

    # bf16 for the HBM->VMEM transfer of the dominant input traffic; math stays f32.
    px = _extract_patches_cl(x).astype(jnp.bfloat16)                   # (3, B, P*HW)

    tb = _pick_block_b(B, block_b)
    nb = pl.cdiv(B, tb)
    bp = nb * tb
    if bp != B:
        px = jnp.pad(px, ((0, 0), (0, bp - B), (0, 0)))

    # Weight prep (free, wrapper side).
    w1_cf = jnp.transpose(w1).reshape(C_IN, BASE_FEATURES, 1).astype(jnp.float32)  # (3, F, 1)
    b1_col = b1.reshape(BASE_FEATURES, 1).astype(jnp.float32)                      # (F, 1)
    wl_t = jnp.pad(jnp.transpose(wl),
                   ((0, 0), (0, KPAD - NUM_CLASSES))).astype(jnp.float32)          # (P*F, KPAD)
    bl_pad = jnp.pad(bl.reshape(1, NUM_CLASSES),
                     ((0, 0), (0, KPAD - NUM_CLASSES))).astype(jnp.float32)        # (1, KPAD)

    out = pl.pallas_call(
        patchnet_kernel,
        out_shape=jax.ShapeDtypeStruct((bp, KPAD), jnp.float32),
        grid=(nb,),
        in_specs=[
            pl.BlockSpec((C_IN, tb, NUM_PATCHES * HW), lambda b: (0, b, 0)),
            pl.BlockSpec((C_IN, BASE_FEATURES, 1), lambda b: (0, 0, 0)),
            pl.BlockSpec((BASE_FEATURES, 1), lambda b: (0, 0)),
            pl.BlockSpec((NUM_PATCHES * BASE_FEATURES, KPAD), lambda b: (0, 0)),
            pl.BlockSpec((1, KPAD), lambda b: (0, 0)),
        ],
        out_specs=pl.BlockSpec((tb, KPAD), lambda b: (b, 0)),
        compiler_params=pltpu.CompilerParams(
            dimension_semantics=("parallel",),      # shards batch tiles across TensorCores
            vmem_limit_bytes=48 * 1024 * 1024,      # f32 conv temporaries scale with tb
        ),
    )(px, w1_cf, b1_col, wl_t, bl_pad)

    return out[:B, :NUM_CLASSES]


def patchnet_reference(x, params):
    """Pure-JAX reference with identical semantics (incl. bf16 input rounding)."""
    w1, b1, wl, bl = params
    B = x.shape[0]
    px = _extract_patches_cl(x).astype(jnp.bfloat16).astype(jnp.float32)  # (3, B, 256)
    px = px.reshape(C_IN, B, NUM_PATCHES, HW)                             # (3, B, P, HW)
    s = sum(px[c][:, :, None, :] * w1[None, None, :, c, None]
            for c in range(C_IN))                                         # (B, P, F, HW)
    s = jnp.maximum(s + b1[None, None, :, None], 0.0)
    feats = jnp.mean(s, axis=-1)                                          # (B, P, F)
    flat = feats.reshape(B, -1)                                           # (B, P*F)
    return jnp.dot(flat, wl.T, precision=jax.lax.Precision.HIGHEST) + bl


def init_params(key):
    k1, k2, k3, k4 = jax.random.split(key, 4)
    w1 = jax.random.normal(k1, (BASE_FEATURES, C_IN), jnp.float32) * 0.1
    b1 = jax.random.normal(k2, (BASE_FEATURES,), jnp.float32) * 0.1
    wl = jax.random.normal(k3, (NUM_CLASSES, BASE_FEATURES * NUM_PATCHES), jnp.float32) * 0.05
    bl = jax.random.normal(k4, (NUM_CLASSES,), jnp.float32) * 0.05
    return (w1, b1, wl, bl)


if __name__ == "__main__":
    key = jax.random.PRNGKey(0)
    kx, kp = jax.random.split(key)
    x = jax.random.normal(kx, (2, 3, IMAGE_SIZE, IMAGE_SIZE), jnp.float32)
    params = init_params(kp)

    out = patchnet_forward(x, params)
    out = jax.block_until_ready(out)

    ref = patchnet_reference(x, params)
    assert out.shape == (2, NUM_CLASSES), out.shape
    np.testing.assert_allclose(np.asarray(out), np.asarray(ref), rtol=1e-3, atol=1e-3)
    print("KERNEL_OK")
</pallas_src>

<mosaic_0001>
module attributes {stable_mosaic.version = 11 : i64} {
  func.func @patchnet_kernel(%arg0: i32, %arg1: memref<3x2x256xbf16, #tpu.memory_space<vmem>>, %arg2: memref<3x32x1xf32, #tpu.memory_space<vmem>>, %arg3: memref<32x1xf32, #tpu.memory_space<vmem>>, %arg4: memref<128x128xf32, #tpu.memory_space<vmem>>, %arg5: memref<1x128xf32, #tpu.memory_space<vmem>>, %arg6: memref<2x128xf32, #tpu.memory_space<vmem>>) attributes {dimension_semantics = [#tpu.dimension_semantics<parallel>], iteration_bounds = array<i64: 1>, scalar_prefetch = 0 : i64, scratch_operands = 0 : i64, tpu.core_type = #tpu.core_type<tc>, window_params = [{transform_indices = @transform_0, window_bounds = array<i64: 3, 2, 256>}, {pipeline_mode = #tpu.pipeline_mode<synchronous>, transform_indices = @transform_1, window_bounds = array<i64: 3, 32, 1>}, {pipeline_mode = #tpu.pipeline_mode<synchronous>, transform_indices = @transform_2, window_bounds = array<i64: 32, 1>}, {pipeline_mode = #tpu.pipeline_mode<synchronous>, transform_indices = @transform_3, window_bounds = array<i64: 128, 128>}, {pipeline_mode = #tpu.pipeline_mode<synchronous>, transform_indices = @transform_4, window_bounds = array<i64: 1, 128>}, {transform_indices = @transform_5, window_bounds = array<i64: 2, 128>}]} {
    %c0 = arith.constant 0 : index
    %c0_0 = arith.constant 0 : index
    %c0_1 = arith.constant 0 : index
    %0 = vector.load %arg1[%c0, %c0_0, %c0_1] : memref<3x2x256xbf16, #tpu.memory_space<vmem>>, vector<1x2x256xbf16>
    %1 = vector.shape_cast %0 : vector<1x2x256xbf16> to vector<2x256xbf16>
    %2 = arith.extf %1 : vector<2x256xbf16> to vector<2x256xf32>
    %c1 = arith.constant 1 : index
    %c0_2 = arith.constant 0 : index
    %c0_3 = arith.constant 0 : index
    %3 = vector.load %arg1[%c1, %c0_2, %c0_3] : memref<3x2x256xbf16, #tpu.memory_space<vmem>>, vector<1x2x256xbf16>
    %4 = vector.shape_cast %3 : vector<1x2x256xbf16> to vector<2x256xbf16>
    %5 = arith.extf %4 : vector<2x256xbf16> to vector<2x256xf32>
    %c2 = arith.constant 2 : index
    %c0_4 = arith.constant 0 : index
    %c0_5 = arith.constant 0 : index
    %6 = vector.load %arg1[%c2, %c0_4, %c0_5] : memref<3x2x256xbf16, #tpu.memory_space<vmem>>, vector<1x2x256xbf16>
    %7 = vector.shape_cast %6 : vector<1x2x256xbf16> to vector<2x256xbf16>
    %8 = arith.extf %7 : vector<2x256xbf16> to vector<2x256xf32>
    %c0_6 = arith.constant 0 : index
    %c0_7 = arith.constant 0 : index
    %c0_8 = arith.constant 0 : index
    %9 = vector.load %arg2[%c0_6, %c0_7, %c0_8] : memref<3x32x1xf32, #tpu.memory_space<vmem>>, vector<3x32x1xf32>
    %c0_9 = arith.constant 0 : index
    %c0_10 = arith.constant 0 : index
    %10 = vector.load %arg3[%c0_9, %c0_10] : memref<32x1xf32, #tpu.memory_space<vmem>>, vector<32x1xf32>
    %11 = vector.shape_cast %2 : vector<2x256xf32> to vector<2x1x256xf32>
    %12 = vector.extract_strided_slice %9 {offsets = [0, 0, 0], sizes = [1, 16, 1], strides = [1, 1, 1]} : vector<3x32x1xf32> to vector<1x16x1xf32>
    %13 = vector.shape_cast %12 : vector<1x16x1xf32> to vector<16x1xf32>
    %14 = vector.shape_cast %13 : vector<16x1xf32> to vector<1x16x1xf32>
    %15 = vector.broadcast %11 : vector<2x1x256xf32> to vector<2x16x256xf32>
    %16 = vector.broadcast %14 : vector<1x16x1xf32> to vector<2x16x256xf32>
    %17 = arith.mulf %15, %16 : vector<2x16x256xf32>
    %18 = vector.shape_cast %5 : vector<2x256xf32> to vector<2x1x256xf32>
    %19 = vector.extract_strided_slice %9 {offsets = [1, 0, 0], sizes = [1, 16, 1], strides = [1, 1, 1]} : vector<3x32x1xf32> to vector<1x16x1xf32>
    %20 = vector.shape_cast %19 : vector<1x16x1xf32> to vector<16x1xf32>
    %21 = vector.shape_cast %20 : vector<16x1xf32> to vector<1x16x1xf32>
    %22 = vector.broadcast %18 : vector<2x1x256xf32> to vector<2x16x256xf32>
    %23 = vector.broadcast %21 : vector<1x16x1xf32> to vector<2x16x256xf32>
    %24 = arith.mulf %22, %23 : vector<2x16x256xf32>
    %25 = arith.addf %17, %24 : vector<2x16x256xf32>
    %26 = vector.shape_cast %8 : vector<2x256xf32> to vector<2x1x256xf32>
    %27 = vector.extract_strided_slice %9 {offsets = [2, 0, 0], sizes = [1, 16, 1], strides = [1, 1, 1]} : vector<3x32x1xf32> to vector<1x16x1xf32>
    %28 = vector.shape_cast %27 : vector<1x16x1xf32> to vector<16x1xf32>
    %29 = vector.shape_cast %28 : vector<16x1xf32> to vector<1x16x1xf32>
    %30 = vector.broadcast %26 : vector<2x1x256xf32> to vector<2x16x256xf32>
    %31 = vector.broadcast %29 : vector<1x16x1xf32> to vector<2x16x256xf32>
    %32 = arith.mulf %30, %31 : vector<2x16x256xf32>
    %33 = arith.addf %25, %32 : vector<2x16x256xf32>
    %34 = vector.extract_strided_slice %10 {offsets = [0, 0], sizes = [16, 1], strides = [1, 1]} : vector<32x1xf32> to vector<16x1xf32>
    %35 = vector.shape_cast %34 : vector<16x1xf32> to vector<1x16x1xf32>
    %36 = vector.broadcast %35 : vector<1x16x1xf32> to vector<2x16x256xf32>
    %37 = arith.addf %33, %36 : vector<2x16x256xf32>
    %cst = arith.constant 0.000000e+00 : f32
    %38 = vector.broadcast %cst : f32 to vector<2x16x256xf32>
    %39 = arith.maximumf %37, %38 : vector<2x16x256xf32>
    %40 = vector.extract_strided_slice %39 {offsets = [0, 0, 0], sizes = [2, 16, 64], strides = [1, 1, 1]} : vector<2x16x256xf32> to vector<2x16x64xf32>
    %cst_11 = arith.constant dense<0.000000e+00> : vector<2x16xf32>
    %41 = vector.multi_reduction <add>, %40, %cst_11 [2] : vector<2x16x64xf32> to vector<2x16xf32>
    %cst_12 = arith.constant 1.562500e-02 : f32
    %42 = vector.broadcast %cst_12 : f32 to vector<2x16xf32>
    %43 = arith.mulf %41, %42 : vector<2x16xf32>
    %44 = vector.extract_strided_slice %39 {offsets = [0, 0, 64], sizes = [2, 16, 64], strides = [1, 1, 1]} : vector<2x16x256xf32> to vector<2x16x64xf32>
    %cst_13 = arith.constant dense<0.000000e+00> : vector<2x16xf32>
    %45 = vector.multi_reduction <add>, %44, %cst_13 [2] : vector<2x16x64xf32> to vector<2x16xf32>
    %cst_14 = arith.constant 1.562500e-02 : f32
    %46 = vector.broadcast %cst_14 : f32 to vector<2x16xf32>
    %47 = arith.mulf %45, %46 : vector<2x16xf32>
    %48 = vector.extract_strided_slice %39 {offsets = [0, 0, 128], sizes = [2, 16, 64], strides = [1, 1, 1]} : vector<2x16x256xf32> to vector<2x16x64xf32>
    %cst_15 = arith.constant dense<0.000000e+00> : vector<2x16xf32>
    %49 = vector.multi_reduction <add>, %48, %cst_15 [2] : vector<2x16x64xf32> to vector<2x16xf32>
    %cst_16 = arith.constant 1.562500e-02 : f32
    %50 = vector.broadcast %cst_16 : f32 to vector<2x16xf32>
    %51 = arith.mulf %49, %50 : vector<2x16xf32>
    %52 = vector.extract_strided_slice %39 {offsets = [0, 0, 192], sizes = [2, 16, 64], strides = [1, 1, 1]} : vector<2x16x256xf32> to vector<2x16x64xf32>
    %cst_17 = arith.constant dense<0.000000e+00> : vector<2x16xf32>
    %53 = vector.multi_reduction <add>, %52, %cst_17 [2] : vector<2x16x64xf32> to vector<2x16xf32>
    %cst_18 = arith.constant 1.562500e-02 : f32
    %54 = vector.broadcast %cst_18 : f32 to vector<2x16xf32>
    %55 = arith.mulf %53, %54 : vector<2x16xf32>
    %56 = vector.shape_cast %2 : vector<2x256xf32> to vector<2x1x256xf32>
    %57 = vector.extract_strided_slice %9 {offsets = [0, 16, 0], sizes = [1, 16, 1], strides = [1, 1, 1]} : vector<3x32x1xf32> to vector<1x16x1xf32>
    %58 = vector.shape_cast %57 : vector<1x16x1xf32> to vector<16x1xf32>
    %59 = vector.shape_cast %58 : vector<16x1xf32> to vector<1x16x1xf32>
    %60 = vector.broadcast %56 : vector<2x1x256xf32> to vector<2x16x256xf32>
    %61 = vector.broadcast %59 : vector<1x16x1xf32> to vector<2x16x256xf32>
    %62 = arith.mulf %60, %61 : vector<2x16x256xf32>
    %63 = vector.shape_cast %5 : vector<2x256xf32> to vector<2x1x256xf32>
    %64 = vector.extract_strided_slice %9 {offsets = [1, 16, 0], sizes = [1, 16, 1], strides = [1, 1, 1]} : vector<3x32x1xf32> to vector<1x16x1xf32>
    %65 = vector.shape_cast %64 : vector<1x16x1xf32> to vector<16x1xf32>
    %66 = vector.shape_cast %65 : vector<16x1xf32> to vector<1x16x1xf32>
    %67 = vector.broadcast %63 : vector<2x1x256xf32> to vector<2x16x256xf32>
    %68 = vector.broadcast %66 : vector<1x16x1xf32> to vector<2x16x256xf32>
    %69 = arith.mulf %67, %68 : vector<2x16x256xf32>
    %70 = arith.addf %62, %69 : vector<2x16x256xf32>
    %71 = vector.shape_cast %8 : vector<2x256xf32> to vector<2x1x256xf32>
    %72 = vector.extract_strided_slice %9 {offsets = [2, 16, 0], sizes = [1, 16, 1], strides = [1, 1, 1]} : vector<3x32x1xf32> to vector<1x16x1xf32>
    %73 = vector.shape_cast %72 : vector<1x16x1xf32> to vector<16x1xf32>
    %74 = vector.shape_cast %73 : vector<16x1xf32> to vector<1x16x1xf32>
    %75 = vector.broadcast %71 : vector<2x1x256xf32> to vector<2x16x256xf32>
    %76 = vector.broadcast %74 : vector<1x16x1xf32> to vector<2x16x256xf32>
    %77 = arith.mulf %75, %76 : vector<2x16x256xf32>
    %78 = arith.addf %70, %77 : vector<2x16x256xf32>
    %79 = vector.extract_strided_slice %10 {offsets = [16, 0], sizes = [16, 1], strides = [1, 1]} : vector<32x1xf32> to vector<16x1xf32>
    %80 = vector.shape_cast %79 : vector<16x1xf32> to vector<1x16x1xf32>
    %81 = vector.broadcast %80 : vector<1x16x1xf32> to vector<2x16x256xf32>
    %82 = arith.addf %78, %81 : vector<2x16x256xf32>
    %cst_19 = arith.constant 0.000000e+00 : f32
    %83 = vector.broadcast %cst_19 : f32 to vector<2x16x256xf32>
    %84 = arith.maximumf %82, %83 : vector<2x16x256xf32>
    %85 = vector.extract_strided_slice %84 {offsets = [0, 0, 0], sizes = [2, 16, 64], strides = [1, 1, 1]} : vector<2x16x256xf32> to vector<2x16x64xf32>
    %cst_20 = arith.constant dense<0.000000e+00> : vector<2x16xf32>
    %86 = vector.multi_reduction <add>, %85, %cst_20 [2] : vector<2x16x64xf32> to vector<2x16xf32>
    %cst_21 = arith.constant 1.562500e-02 : f32
    %87 = vector.broadcast %cst_21 : f32 to vector<2x16xf32>
    %88 = arith.mulf %86, %87 : vector<2x16xf32>
    %89 = vector.extract_strided_slice %84 {offsets = [0, 0, 64], sizes = [2, 16, 64], strides = [1, 1, 1]} : vector<2x16x256xf32> to vector<2x16x64xf32>
    %cst_22 = arith.constant dense<0.000000e+00> : vector<2x16xf32>
    %90 = vector.multi_reduction <add>, %89, %cst_22 [2] : vector<2x16x64xf32> to vector<2x16xf32>
    %cst_23 = arith.constant 1.562500e-02 : f32
    %91 = vector.broadcast %cst_23 : f32 to vector<2x16xf32>
    %92 = arith.mulf %90, %91 : vector<2x16xf32>
    %93 = vector.extract_strided_slice %84 {offsets = [0, 0, 128], sizes = [2, 16, 64], strides = [1, 1, 1]} : vector<2x16x256xf32> to vector<2x16x64xf32>
    %cst_24 = arith.constant dense<0.000000e+00> : vector<2x16xf32>
    %94 = vector.multi_reduction <add>, %93, %cst_24 [2] : vector<2x16x64xf32> to vector<2x16xf32>
    %cst_25 = arith.constant 1.562500e-02 : f32
    %95 = vector.broadcast %cst_25 : f32 to vector<2x16xf32>
    %96 = arith.mulf %94, %95 : vector<2x16xf32>
    %97 = vector.extract_strided_slice %84 {offsets = [0, 0, 192], sizes = [2, 16, 64], strides = [1, 1, 1]} : vector<2x16x256xf32> to vector<2x16x64xf32>
    %cst_26 = arith.constant dense<0.000000e+00> : vector<2x16xf32>
    %98 = vector.multi_reduction <add>, %97, %cst_26 [2] : vector<2x16x64xf32> to vector<2x16xf32>
    %cst_27 = arith.constant 1.562500e-02 : f32
    %99 = vector.broadcast %cst_27 : f32 to vector<2x16xf32>
    %100 = arith.mulf %98, %99 : vector<2x16xf32>
    %101 = tpu.concatenate %43, %88, %47, %92, %51, %96, %55, %100 in 1 : vector<2x16xf32>, vector<2x16xf32>, vector<2x16xf32>, vector<2x16xf32>, vector<2x16xf32>, vector<2x16xf32>, vector<2x16xf32>, vector<2x16xf32> -> vector<2x128xf32>
    %c0_28 = arith.constant 0 : index
    %c0_29 = arith.constant 0 : index
    %102 = vector.load %arg4[%c0_28, %c0_29] : memref<128x128xf32, #tpu.memory_space<vmem>>, vector<128x128xf32>
    %cst_30 = arith.constant dense<0.000000e+00> : vector<2x128xf32>
    %103 = tpu.matmul %101, %102, %cst_30 {dimension_numbers = #tpu.dot_dimension_numbers<[1], [0], [0], [1], [0, 0, 1, 1], [], []>} : vector<2x128xf32>, vector<128x128xf32>, vector<2x128xf32> -> vector<2x128xf32>
    %c0_31 = arith.constant 0 : index
    %c0_32 = arith.constant 0 : index
    %104 = vector.load %arg5[%c0_31, %c0_32] : memref<1x128xf32, #tpu.memory_space<vmem>>, vector<1x128xf32>
    %105 = vector.broadcast %104 : vector<1x128xf32> to vector<2x128xf32>
    %106 = arith.addf %103, %105 : vector<2x128xf32>
    %c0_33 = arith.constant 0 : index
    %c0_34 = arith.constant 0 : index
    %107 = vector.load %arg6[%c0_33, %c0_34] : memref<2x128xf32, #tpu.memory_space<vmem>>, vector<2x128xf32>
    tpu.vector_store %arg6[%c0_33, %c0_34], %106 {strides = array<i32>} : memref<2x128xf32, #tpu.memory_space<vmem>>, vector<2x128xf32>,
    return
  }
  func.func @transform_0(%arg0: i32) -> (i32, i32, i32) {
    %c0_i32 = arith.constant 0 : i32
    %c0_i32_0 = arith.constant 0 : i32
    %c0_i32_1 = arith.constant 0 : i32
    return %c0_i32, %arg0, %c0_i32_0 : i32, i32, i32
  }
  func.func @transform_1(%arg0: i32) -> (i32, i32, i32) {
    %c0_i32 = arith.constant 0 : i32
    %c0_i32_0 = arith.constant 0 : i32
    %c0_i32_1 = arith.constant 0 : i32
    %c0_i32_2 = arith.constant 0 : i32
    return %c0_i32, %c0_i32_0, %c0_i32_1 : i32, i32, i32
  }
  func.func @transform_2(%arg0: i32) -> (i32, i32) {
    %c0_i32 = arith.constant 0 : i32
    %c0_i32_0 = arith.constant 0 : i32
    %c0_i32_1 = arith.constant 0 : i32
    return %c0_i32, %c0_i32_0 : i32, i32
  }
  func.func @transform_3(%arg0: i32) -> (i32, i32) {
    %c0_i32 = arith.constant 0 : i32
    %c0_i32_0 = arith.constant 0 : i32
    %c0_i32_1 = arith.constant 0 : i32
    return %c0_i32, %c0_i32_0 : i32, i32
  }
  func.func @transform_4(%arg0: i32) -> (i32, i32) {
    %c0_i32 = arith.constant 0 : i32
    %c0_i32_0 = arith.constant 0 : i32
    %c0_i32_1 = arith.constant 0 : i32
    return %c0_i32, %c0_i32_0 : i32, i32
  }
  func.func @transform_5(%arg0: i32) -> (i32, i32) {
    %c0_i32 = arith.constant 0 : i32
    %c0_i32_0 = arith.constant 0 : i32
    return %arg0, %c0_i32 : i32, i32
  }
}

</mosaic_0001>

<llo_original>
// kernel: tpu_custom_call.1
$region0: #{tpu_custom_call.1}
  #allocation0 [shape = 'u32[]', space=smem, size = 0x4, offset = 0x4, fixed_abs, tag = 'smem constant byte address 0x4 - core index']
  #allocation1 [shape = 'u32[72,128]{1,0:T(1,128)}', space=vmem, size = 0x9000, scoped, tag = 'internal scratch']
  %s0 = inlined_call_operand.hbm [shape: bf16[3,2,256], index: 0, kind: input, shape index: {}]
  %s1 = inlined_call_operand.vmem [shape: f32[3,32,1], index: 1, kind: input, shape index: {}]
  %s2 = inlined_call_operand.vmem [shape: f32[32,1], index: 2, kind: input, shape index: {}]
  %s3 = inlined_call_operand.vmem [shape: f32[128,128], index: 3, kind: input, shape index: {}]
  %s4 = inlined_call_operand.vmem [shape: f32[1,128], index: 4, kind: input, shape index: {}]
  %s5 = inlined_call_operand.hbm [shape: f32[2,128], index: 5, kind: output, shape index: {}]
  %s6 = sld [smem:[#allocation0]]
  $region34: #{tpu_custom_call.1} parent=0
    _
  %s8 = ssub.s32 1, %s6
  %s9 = scalar_select 0, %s8, %s6
  $region1: #{tpu_custom_call.1} parent=0
    #allocation2 [shape = 'u8[3072]{0}', space=vmem, size = 0xc00, scoped, tag = 'input window, operand 0, single buffered']
    #allocation3 [shape = 's32[1]{0}', space=sflag, size = 0x4, scoped, tag = 'scoped memory for tpu_custom_call.1']
    #allocation4 [shape = 's32[1]{0}', space=sflag, size = 0x4, scoped, tag = 'scoped memory for tpu_custom_call.1']
    #allocation5 [shape = 'u8[1024]{0}', space=vmem, size = 0x400, scoped, tag = 'output window, operand 0, single buffered']
    %10 = vsyncpa [#allocation3], 0
    %11 = vsyncpa [#allocation4], 0
    // Predicated region
    $region2: #{tpu_custom_call.1} parent=1 // pred_check
      _
    $region3: #{tpu_custom_call.1} parent=1 // pred_check_branch
      %13 = sbr.rel (0) target = $region5
    $region4: #{tpu_custom_call.1} parent=1 // pred_region
      %15 = vsyncadd [#allocation3], 0
      %s16 = sshll.u32 %s0, 4
      %s17 = int_to_ptr.hbm [resolvable:$true] %s16
      %s18 = sshll.u32 [#allocation2], 4
      %s19 = int_to_ptr.vmem [resolvable:$true] %s18
      %24 = dma.hbm_to_vmem [thread:$0]  %s17, 96, %s19, [#allocation3], 32, 32, 2
    $region5: #{tpu_custom_call.1} parent=1 // pred_fallthru
      _
    // Predicated region
    $region6: #{tpu_custom_call.1} parent=1 // pred_check
      _
    $region7: #{tpu_custom_call.1} parent=1 // pred_check_branch
      %26 = sbr.rel (0) target = $region9
    $region8: #{tpu_custom_call.1} parent=1 // pred_region
      _
    $region9: #{tpu_custom_call.1} parent=1 // pred_fallthru
      _
    // Predicated region
    $region10: #{tpu_custom_call.1} parent=1 // pred_check
      _
    $region11: #{tpu_custom_call.1} parent=1 // pred_check_branch
      %28 = sbr.rel (0) target = $region13
    $region12: #{tpu_custom_call.1} parent=1 // pred_region
      _
    $region13: #{tpu_custom_call.1} parent=1 // pred_fallthru
      _
    // Predicated region
    $region14: #{tpu_custom_call.1} parent=1 // pred_check
      _
    $region15: #{tpu_custom_call.1} parent=1 // pred_check_branch
      %30 = sbr.rel (0) target = $region17
    $region16: #{tpu_custom_call.1} parent=1 // pred_region
      _
    $region17: #{tpu_custom_call.1} parent=1 // pred_fallthru
      _
    // Predicated region
    $region18: #{tpu_custom_call.1} parent=1 // pred_check
      _
    $region19: #{tpu_custom_call.1} parent=1 // pred_check_branch
      %32 = sbr.rel (0) target = $region21
    $region20: #{tpu_custom_call.1} parent=1 // pred_region
      _
    $region21: #{tpu_custom_call.1} parent=1 // pred_fallthru
      _
    // Predicated region
    $region22: #{tpu_custom_call.1} parent=1 // pred_check
      _
    $region23: #{tpu_custom_call.1} parent=1 // pred_check_branch
      %34 = sbr.rel (0) target = $region25
    $region24: #{tpu_custom_call.1} parent=1 // pred_region
      %36 = dma.done [#allocation3], 96
    $region25: #{tpu_custom_call.1} parent=1 // pred_fallthru
      _
    %v37 = vld [vmem:[#allocation2] sm:$0x3]
    %v38 = vunpack.c.l.bf16 %v37
    %s39 = scalar_lea.vmem [#allocation2], 2
    %v40 = vld [vmem:[%s39] sm:$0x3]
    %v41 = vunpack.c.l.bf16 %v40
    %s42 = scalar_lea.vmem [#allocation2], 4
    %v43 = vld [vmem:[%s42] sm:$0x3]
    %v44 = vunpack.c.l.bf16 %v43
    %v45 = vld [vmem:[%s1] sm:$0xff]
    %v46 = vld [vmem:[%s1 + $0x8] sm:$0xff]
    %v47 = vld [vmem:[%s1 + $0x10] sm:$0xff]
    %v48 = vld [vmem:[%s1 + $0x18] sm:$0xff]
    %v49 = vld [vmem:[%s1 + $0x20] sm:$0xff]
    %v50 = vld [vmem:[%s1 + $0x28] sm:$0xff]
    %v51 = vld [vmem:[%s1 + $0x30] sm:$0xff]
    %v52 = vld [vmem:[%s1 + $0x38] sm:$0xff]
    %v53 = vld [vmem:[%s1 + $0x40] sm:$0xff]
    %v54 = vld [vmem:[%s1 + $0x48] sm:$0xff]
    %v55 = vld [vmem:[%s1 + $0x50] sm:$0xff]
    %v56 = vld [vmem:[%s1 + $0x58] sm:$0xff]
    %v57 = vld [vmem:[%s2] sm:$0xff]
    %v58 = vld [vmem:[%s2 + $0x8] sm:$0xff]
    %v59 = vld [vmem:[%s2 + $0x10] sm:$0xff]
    %v60 = vld [vmem:[%s2 + $0x18] sm:$0xff]
    %v62 = vrot.slane %v38, 1
    %v63 = vrot.slane %v38, 2
    %v64 = vrot.slane %v38, 3
    %vm65 = vcmask 1040384
    %v66 = vsel %vm65, %v38, %v62
    %vm67 = vcmask 1042434
    %v68 = vsel %vm67, %v63, %v64
    %vm69 = vcmask 1041408
    %v70 = vsel %vm69, %v66, %v68
    %vm71 = vcmask 1041409
    %v72 = vsel %vm71, %v38, %v62
    %vm73 = vcmask 1043459
    %v74 = vsel %vm73, %v63, %v64
    %vm75 = vcmask 1042433
    %v76 = vsel %vm75, %v72, %v74
    %v77 = vrot.slane %v76, 1
    %v78 = vperm.slane %v70, 0
    %v79 = vperm.slane %v70, 1
    %v80 = vperm.slane %v77, 0
    %v81 = vperm.slane %v77, 1
    %87 = vset.pattern.permute.xlu0 0
    %88 = vperm.xlu0 %87, %v45
    %v89 = vpop.permute.xlu0 %88
    %92 = vset.pattern.permute.xlu0 0
    %93 = vperm.xlu0 %92, %v46
    %v94 = vpop.permute.xlu0 %93
    %v96 = vmul.f32 %v78, %v89
    %v97 = vmul.f32 %v79, %v89
    %v98 = vmul.f32 %v78, %v94
    %v99 = vmul.f32 %v79, %v94
    %v100 = vmul.f32 %v80, %v89
    %v101 = vmul.f32 %v81, %v89
    %v102 = vmul.f32 %v80, %v94
    %v103 = vmul.f32 %v81, %v94
    %v105 = vrot.slane %v41, 1
    %v106 = vrot.slane %v41, 2
    %v107 = vrot.slane %v41, 3
    %v108 = vsel %vm65, %v41, %v105
    %v109 = vsel %vm67, %v106, %v107
    %v110 = vsel %vm69, %v108, %v109
    %v111 = vsel %vm71, %v41, %v105
    %v112 = vsel %vm73, %v106, %v107
    %v113 = vsel %vm75, %v111, %v112
    %v114 = vrot.slane %v113, 1
    %v115 = vperm.slane %v110, 0
    %v116 = vperm.slane %v110, 1
    %v117 = vperm.slane %v114, 0
    %v118 = vperm.slane %v114, 1
    %124 = vset.pattern.permute.xlu0 0
    %125 = vperm.xlu0 %124, %v49
    %v126 = vpop.permute.xlu0 %125
    %129 = vset.pattern.permute.xlu0 0
    %130 = vperm.xlu0 %129, %v50
    %v131 = vpop.permute.xlu0 %130
    %v133 = vmul.f32 %v115, %v126
    %v134 = vmul.f32 %v116, %v126
    %v135 = vmul.f32 %v115, %v131
    %v136 = vmul.f32 %v116, %v131
    %v137 = vmul.f32 %v117, %v126
    %v138 = vmul.f32 %v118, %v126
    %v139 = vmul.f32 %v117, %v131
    %v140 = vmul.f32 %v118, %v131
    %v141 = vadd.f32 %v96, %v133
    %v142 = vadd.f32 %v97, %v134
    %v143 = vadd.f32 %v98, %v135
    %v144 = vadd.f32 %v99, %v136
    %v145 = vadd.f32 %v100, %v137
    %v146 = vadd.f32 %v101, %v138
    %v147 = vadd.f32 %v102, %v139
    %v148 = vadd.f32 %v103, %v140
    %v150 = vrot.slane %v44, 1
    %v151 = vrot.slane %v44, 2
    %v152 = vrot.slane %v44, 3
    %v153 = vsel %vm65, %v44, %v150
    %v154 = vsel %vm67, %v151, %v152
    %v155 = vsel %vm69, %v153, %v154
    %v156 = vsel %vm71, %v44, %v150
    %v157 = vsel %vm73, %v151, %v152
    %v158 = vsel %vm75, %v156, %v157
    %v159 = vrot.slane %v158, 1
    %v160 = vperm.slane %v155, 0
    %v161 = vperm.slane %v155, 1
    %v162 = vperm.slane %v159, 0
    %v163 = vperm.slane %v159, 1
    %169 = vset.pattern.permute.xlu0 0
    %170 = vperm.xlu0 %169, %v53
    %v171 = vpop.permute.xlu0 %170
    %174 = vset.pattern.permute.xlu0 0
    %175 = vperm.xlu0 %174, %v54
    %v176 = vpop.permute.xlu0 %175
    %v178 = vmul.f32 %v160, %v171
    %v179 = vmul.f32 %v161, %v171
    %v180 = vmul.f32 %v160, %v176
    %v181 = vmul.f32 %v161, %v176
    %v182 = vmul.f32 %v162, %v171
    %v183 = vmul.f32 %v163, %v171
    %v184 = vmul.f32 %v162, %v176
    %v185 = vmul.f32 %v163, %v176
    %v186 = vadd.f32 %v141, %v178
    %v187 = vadd.f32 %v142, %v179
    %v188 = vadd.f32 %v143, %v180
    %v189 = vadd.f32 %v144, %v181
    %v190 = vadd.f32 %v145, %v182
    %v191 = vadd.f32 %v146, %v183
    %v192 = vadd.f32 %v147, %v184
    %v193 = vadd.f32 %v148, %v185
    %195 = vset.pattern.permute.xlu0 0
    %196 = vperm.xlu0 %195, %v57
    %v197 = vpop.permute.xlu0 %196
    %200 = vset.pattern.permute.xlu0 0
    %201 = vperm.xlu0 %200, %v58
    %v202 = vpop.permute.xlu0 %201
    %v204 = vadd.f32 %v186, %v197
    %v205 = vadd.f32 %v187, %v197
    %v206 = vadd.f32 %v188, %v202
    %v207 = vadd.f32 %v189, %v202
    %v208 = vadd.f32 %v190, %v197
    %v209 = vadd.f32 %v191, %v197
    %v210 = vadd.f32 %v192, %v202
    %v211 = vadd.f32 %v193, %v202
    %v212 = vmax.f32 %v204, 0.0
    %v213 = vmax.f32 %v205, 0.0
    %v214 = vmax.f32 %v206, 0.0
    %v215 = vmax.f32 %v207, 0.0
    %v216 = vmax.f32 %v208, 0.0
    %v217 = vmax.f32 %v209, 0.0
    %v218 = vmax.f32 %v210, 0.0
    %v219 = vmax.f32 %v211, 0.0
    %vm220 = vcmask 523264
    %v221 = vsel %vm220, %v212, 0.0
    %222 = vadd.xlane.f32.xlu0 %v221
    %v223 = vpop.xlane.xlu0 %222
    %v224 = vsel %vm220, %v214, 0.0
    %225 = vadd.xlane.f32.xlu0 %v224
    %v226 = vpop.xlane.xlu0 %225
    %v227 = vsel %vm220, %v216, 0.0
    %228 = vadd.xlane.f32.xlu0 %v227
    %v229 = vpop.xlane.xlu0 %228
    %v230 = vsel %vm220, %v218, 0.0
    %231 = vadd.xlane.f32.xlu0 %v230
    %v232 = vpop.xlane.xlu0 %231
    %v233 = vmul.f32 %v223, 0.015625
    %v234 = vmul.f32 %v226, 0.015625
    %v235 = vmul.f32 %v229, 0.015625
    %v236 = vmul.f32 %v232, 0.015625
    %241 = vrot.lane.b32.xlu0 %v212, 64
    %v242 = vpop.permute.xlu0 %241
    %243 = vrot.lane.b32.xlu0 %v214, 64
    %v244 = vpop.permute.xlu0 %243
    %245 = vrot.lane.b32.xlu0 %v216, 64
    %v246 = vpop.permute.xlu0 %245
    %247 = vrot.lane.b32.xlu0 %v218, 64
    %v248 = vpop.permute.xlu0 %247
    %v253 = vsel %vm220, %v242, 0.0
    %254 = vadd.xlane.f32.xlu0 %v253
    %v255 = vpop.xlane.xlu0 %254
    %v256 = vsel %vm220, %v244, 0.0
    %257 = vadd.xlane.f32.xlu0 %v256
    %v258 = vpop.xlane.xlu0 %257
    %v259 = vsel %vm220, %v246, 0.0
    %260 = vadd.xlane.f32.xlu0 %v259
    %v261 = vpop.xlane.xlu0 %260
    %v262 = vsel %vm220, %v248, 0.0
    %263 = vadd.xlane.f32.xlu0 %v262
    %v264 = vpop.xlane.xlu0 %263
    %v265 = vmul.f32 %v255, 0.015625
    %v266 = vmul.f32 %v258, 0.015625
    %v267 = vmul.f32 %v261, 0.015625
    %v268 = vmul.f32 %v264, 0.015625
    %v269 = vsel %vm220, %v213, 0.0
    %270 = vadd.xlane.f32.xlu0 %v269
    %v271 = vpop.xlane.xlu0 %270
    %v272 = vsel %vm220, %v215, 0.0
    %273 = vadd.xlane.f32.xlu0 %v272
    %v274 = vpop.xlane.xlu0 %273
    %v275 = vsel %vm220, %v217, 0.0
    %276 = vadd.xlane.f32.xlu0 %v275
    %v277 = vpop.xlane.xlu0 %276
    %v278 = vsel %vm220, %v219, 0.0
    %279 = vadd.xlane.f32.xlu0 %v278
    %v280 = vpop.xlane.xlu0 %279
    %v281 = vmul.f32 %v271, 0.015625
    %v282 = vmul.f32 %v274, 0.015625
    %v283 = vmul.f32 %v277, 0.015625
    %v284 = vmul.f32 %v280, 0.015625
    %289 = vrot.lane.b32.xlu0 %v213, 64
    %v290 = vpop.permute.xlu0 %289
    %291 = vrot.lane.b32.xlu0 %v215, 64
    %v292 = vpop.permute.xlu0 %291
    %293 = vrot.lane.b32.xlu0 %v217, 64
    %v294 = vpop.permute.xlu0 %293
    %295 = vrot.lane.b32.xlu0 %v219, 64
    %v296 = vpop.permute.xlu0 %295
    %v301 = vsel %vm220, %v290, 0.0
    %302 = vadd.xlane.f32.xlu0 %v301
    %v303 = vpop.xlane.xlu0 %302
    %v304 = vsel %vm220, %v292, 0.0
    %305 = vadd.xlane.f32.xlu0 %v304
    %v306 = vpop.xlane.xlu0 %305
    %v307 = vsel %vm220, %v294, 0.0
    %308 = vadd.xlane.f32.xlu0 %v307
    %v309 = vpop.xlane.xlu0 %308
    %v310 = vsel %vm220, %v296, 0.0
    %311 = vadd.xlane.f32.xlu0 %v310
    %v312 = vpop.xlane.xlu0 %311
    %v313 = vmul.f32 %v303, 0.015625
    %v314 = vmul.f32 %v306, 0.015625
    %v315 = vmul.f32 %v309, 0.015625
    %v316 = vmul.f32 %v312, 0.015625
    %318 = vset.pattern.permute.xlu0 0
    %319 = vperm.xlu0 %318, %v47
    %v320 = vpop.permute.xlu0 %319
    %323 = vset.pattern.permute.xlu0 0
    %324 = vperm.xlu0 %323, %v48
    %v325 = vpop.permute.xlu0 %324
    %v327 = vmul.f32 %v78, %v320
    %v328 = vmul.f32 %v79, %v320
    %v329 = vmul.f32 %v78, %v325
    %v330 = vmul.f32 %v79, %v325
    %v331 = vmul.f32 %v80, %v320
    %v332 = vmul.f32 %v81, %v320
    %v333 = vmul.f32 %v80, %v325
    %v334 = vmul.f32 %v81, %v325
    %336 = vset.pattern.permute.xlu0 0
    %337 = vperm.xlu0 %336, %v51
    %v338 = vpop.permute.xlu0 %337
    %341 = vset.pattern.permute.xlu0 0
    %342 = vperm.xlu0 %341, %v52
    %v343 = vpop.permute.xlu0 %342
    %v345 = vmul.f32 %v115, %v338
    %v346 = vmul.f32 %v116, %v338
    %v347 = vmul.f32 %v115, %v343
    %v348 = vmul.f32 %v116, %v343
    %v349 = vmul.f32 %v117, %v338
    %v350 = vmul.f32 %v118, %v338
    %v351 = vmul.f32 %v117, %v343
    %v352 = vmul.f32 %v118, %v343
    %v353 = vadd.f32 %v327, %v345
    %v354 = vadd.f32 %v328, %v346
    %v355 = vadd.f32 %v329, %v347
    %v356 = vadd.f32 %v330, %v348
    %v357 = vadd.f32 %v331, %v349
    %v358 = vadd.f32 %v332, %v350
    %v359 = vadd.f32 %v333, %v351
    %v360 = vadd.f32 %v334, %v352
    %362 = vset.pattern.permute.xlu0 0
    %363 = vperm.xlu0 %362, %v55
    %v364 = vpop.permute.xlu0 %363
    %367 = vset.pattern.permute.xlu0 0
    %368 = vperm.xlu0 %367, %v56
    %v369 = vpop.permute.xlu0 %368
    %v371 = vmul.f32 %v160, %v364
    %v372 = vmul.f32 %v161, %v364
    %v373 = vmul.f32 %v160, %v369
    %v374 = vmul.f32 %v161, %v369
    %v375 = vmul.f32 %v162, %v364
    %v376 = vmul.f32 %v163, %v364
    %v377 = vmul.f32 %v162, %v369
    %v378 = vmul.f32 %v163, %v369
    %v379 = vadd.f32 %v353, %v371
    %v380 = vadd.f32 %v354, %v372
    %v381 = vadd.f32 %v355, %v373
    %v382 = vadd.f32 %v356, %v374
    %v383 = vadd.f32 %v357, %v375
    %v384 = vadd.f32 %v358, %v376
    %v385 = vadd.f32 %v359, %v377
    %v386 = vadd.f32 %v360, %v378
    %388 = vset.pattern.permute.xlu0 0
    %389 = vperm.xlu0 %388, %v59
    %v390 = vpop.permute.xlu0 %389
    %393 = vset.pattern.permute.xlu0 0
    %394 = vperm.xlu0 %393, %v60
    %v395 = vpop.permute.xlu0 %394
    %v397 = vadd.f32 %v379, %v390
    %v398 = vadd.f32 %v380, %v390
    %v399 = vadd.f32 %v381, %v395
    %v400 = vadd.f32 %v382, %v395
    %v401 = vadd.f32 %v383, %v390
    %v402 = vadd.f32 %v384, %v390
    %v403 = vadd.f32 %v385, %v395
    %v404 = vadd.f32 %v386, %v395
    %v405 = vmax.f32 %v397, 0.0
    %v406 = vmax.f32 %v398, 0.0
    %v407 = vmax.f32 %v399, 0.0
    %v408 = vmax.f32 %v400, 0.0
    %v409 = vmax.f32 %v401, 0.0
    %v410 = vmax.f32 %v402, 0.0
    %v411 = vmax.f32 %v403, 0.0
    %v412 = vmax.f32 %v404, 0.0
    %v413 = vsel %vm220, %v405, 0.0
    %414 = vadd.xlane.f32.xlu0 %v413
    %v415 = vpop.xlane.xlu0 %414
    %v416 = vsel %vm220, %v407, 0.0
    %417 = vadd.xlane.f32.xlu0 %v416
    %v418 = vpop.xlane.xlu0 %417
    %v419 = vsel %vm220, %v409, 0.0
    %420 = vadd.xlane.f32.xlu0 %v419
    %v421 = vpop.xlane.xlu0 %420
    %v422 = vsel %vm220, %v411, 0.0
    %423 = vadd.xlane.f32.xlu0 %v422
    %v424 = vpop.xlane.xlu0 %423
    %v425 = vmul.f32 %v415, 0.015625
    %v426 = vmul.f32 %v418, 0.015625
    %v427 = vmul.f32 %v421, 0.015625
    %v428 = vmul.f32 %v424, 0.015625
    %433 = vrot.lane.b32.xlu0 %v405, 64
    %v434 = vpop.permute.xlu0 %433
    %435 = vrot.lane.b32.xlu0 %v407, 64
    %v436 = vpop.permute.xlu0 %435
    %437 = vrot.lane.b32.xlu0 %v409, 64
    %v438 = vpop.permute.xlu0 %437
    %439 = vrot.lane.b32.xlu0 %v411, 64
    %v440 = vpop.permute.xlu0 %439
    %v445 = vsel %vm220, %v434, 0.0
    %446 = vadd.xlane.f32.xlu0 %v445
    %v447 = vpop.xlane.xlu0 %446
    %v448 = vsel %vm220, %v436, 0.0
    %449 = vadd.xlane.f32.xlu0 %v448
    %v450 = vpop.xlane.xlu0 %449
    %v451 = vsel %vm220, %v438, 0.0
    %452 = vadd.xlane.f32.xlu0 %v451
    %v453 = vpop.xlane.xlu0 %452
    %v454 = vsel %vm220, %v440, 0.0
    %455 = vadd.xlane.f32.xlu0 %v454
    %v456 = vpop.xlane.xlu0 %455
    %v457 = vmul.f32 %v447, 0.015625
    %v458 = vmul.f32 %v450, 0.015625
    %v459 = vmul.f32 %v453, 0.015625
    %v460 = vmul.f32 %v456, 0.015625
    %v461 = vsel %vm220, %v406, 0.0
    %462 = vadd.xlane.f32.xlu0 %v461
    %v463 = vpop.xlane.xlu0 %462
    %v464 = vsel %vm220, %v408, 0.0
    %465 = vadd.xlane.f32.xlu0 %v464
    %v466 = vpop.xlane.xlu0 %465
    %v467 = vsel %vm220, %v410, 0.0
    %468 = vadd.xlane.f32.xlu0 %v467
    %v469 = vpop.xlane.xlu0 %468
    %v470 = vsel %vm220, %v412, 0.0
    %471 = vadd.xlane.f32.xlu0 %v470
    %v472 = vpop.xlane.xlu0 %471
    %v473 = vmul.f32 %v463, 0.015625
    %v474 = vmul.f32 %v466, 0.015625
    %v475 = vmul.f32 %v469, 0.015625
    %v476 = vmul.f32 %v472, 0.015625
    %481 = vrot.lane.b32.xlu0 %v406, 64
    %v482 = vpop.permute.xlu0 %481
    %483 = vrot.lane.b32.xlu0 %v408, 64
    %v484 = vpop.permute.xlu0 %483
    %485 = vrot.lane.b32.xlu0 %v410, 64
    %v486 = vpop.permute.xlu0 %485
    %487 = vrot.lane.b32.xlu0 %v412, 64
    %v488 = vpop.permute.xlu0 %487
    %v493 = vsel %vm220, %v482, 0.0
    %494 = vadd.xlane.f32.xlu0 %v493
    %v495 = vpop.xlane.xlu0 %494
    %v496 = vsel %vm220, %v484, 0.0
    %497 = vadd.xlane.f32.xlu0 %v496
    %v498 = vpop.xlane.xlu0 %497
    %v499 = vsel %vm220, %v486, 0.0
    %500 = vadd.xlane.f32.xlu0 %v499
    %v501 = vpop.xlane.xlu0 %500
    %v502 = vsel %vm220, %v488, 0.0
    %503 = vadd.xlane.f32.xlu0 %v502
    %v504 = vpop.xlane.xlu0 %503
    %v505 = vmul.f32 %v495, 0.015625
    %v506 = vmul.f32 %v498, 0.015625
    %v507 = vmul.f32 %v501, 0.015625
    %v508 = vmul.f32 %v504, 0.015625
    %v513 = vlaneseq
    %v514 = vand.u32 %v513, 127
    %v515 = vperm.slane %v233, %v514
    %v516 = vadd.s32 %v514, 4294967288
    %v517 = vperm.slane %v234, %v516
    %vm518 = vcmask 130112
    %v519 = vsel %vm518, %v517, %v515
    %v520 = vperm.slane %v235, %v514
    %v521 = vperm.slane %v236, %v516
    %v522 = vsel %vm518, %v521, %v520
    %v523 = vsel %vm71, %v522, %v519
    %v529 = vadd.s32 %v514, 4294967280
    %v530 = vperm.slane %v425, %v529
    %v531 = vadd.s32 %v514, 4294967272
    %v532 = vperm.slane %v426, %v531
    %vm533 = vcmask 261312
    %v534 = vsel %vm533, %v532, %v530
    %v535 = vperm.slane %v427, %v529
    %v536 = vperm.slane %v428, %v531
    %v537 = vsel %vm533, %v536, %v535
    %v538 = vsel %vm71, %v537, %v534
    %v544 = vadd.s32 %v514, 4294967264
    %v545 = vperm.slane %v265, %v544
    %v546 = vadd.s32 %v514, 4294967256
    %v547 = vperm.slane %v266, %v546
    %vm548 = vcmask 392512
    %v549 = vsel %vm548, %v547, %v545
    %v550 = vperm.slane %v267, %v544
    %v551 = vperm.slane %v268, %v546
    %v552 = vsel %vm548, %v551, %v550
    %v553 = vsel %vm71, %v552, %v549
    %v559 = vadd.s32 %v514, 4294967248
    %v560 = vperm.slane %v457, %v559
    %v561 = vadd.s32 %v514, 4294967240
    %v562 = vperm.slane %v458, %v561
    %vm563 = vcmask 523712
    %v564 = vsel %vm563, %v562, %v560
    %v565 = vperm.slane %v459, %v559
    %v566 = vperm.slane %v460, %v561
    %v567 = vsel %vm563, %v566, %v565
    %v568 = vsel %vm71, %v567, %v564
    %v574 = vadd.s32 %v514, 4294967232
    %v575 = vperm.slane %v281, %v574
    %v576 = vadd.s32 %v514, 4294967224
    %v577 = vperm.slane %v282, %v576
    %vm578 = vcmask 654912
    %v579 = vsel %vm578, %v577, %v575
    %v580 = vperm.slane %v283, %v574
    %v581 = vperm.slane %v284, %v576
    %v582 = vsel %vm578, %v581, %v580
    %v583 = vsel %vm71, %v582, %v579
    %v589 = vadd.s32 %v514, 4294967216
    %v590 = vperm.slane %v473, %v589
    %v591 = vadd.s32 %v514, 4294967208
    %v592 = vperm.slane %v474, %v591
    %vm593 = vcmask 786112
    %v594 = vsel %vm593, %v592, %v590
    %v595 = vperm.slane %v475, %v589
    %v596 = vperm.slane %v476, %v591
    %v597 = vsel %vm593, %v596, %v595
    %v598 = vsel %vm71, %v597, %v594
    %v604 = vadd.s32 %v514, 4294967200
    %v605 = vperm.slane %v313, %v604
    %v606 = vadd.s32 %v514, 4294967192
    %v607 = vperm.slane %v314, %v606
    %vm608 = vcmask 917312
    %v609 = vsel %vm608, %v607, %v605
    %v610 = vperm.slane %v315, %v604
    %v611 = vperm.slane %v316, %v606
    %v612 = vsel %vm608, %v611, %v610
    %v613 = vsel %vm71, %v612, %v609
    %v619 = vadd.s32 %v514, 4294967184
    %v620 = vperm.slane %v505, %v619
    %v621 = vadd.s32 %v514, 4294967176
    %v622 = vperm.slane %v506, %v621
    %vm623 = vcmask 1048512
    %v624 = vsel %vm623, %v622, %v620
    %v625 = vperm.slane %v507, %v619
    %v626 = vperm.slane %v508, %v621
    %v627 = vsel %vm623, %v626, %v625
    %v628 = vsel %vm71, %v627, %v624
    %vm630 = vcmask 130048
    %v631 = vsel %vm630, %v523, %v538
    %vm632 = vcmask 261120
    %v633 = vsel %vm632, %v631, %v553
    %vm634 = vcmask 392192
    %v635 = vsel %vm634, %v633, %v568
    %v636 = vsel %vm220, %v635, %v583
    %vm637 = vcmask 654336
    %v638 = vsel %vm637, %v636, %v598
    %vm639 = vcmask 785408
    %v640 = vsel %vm639, %v638, %v613
    %vm641 = vcmask 916480
    %v642 = vsel %vm641, %v640, %v628
    %v643 = vld [vmem:[%s3] sm:$0xff]
    %v644 = vld [vmem:[%s3 + $0x8] sm:$0xff]
    %v645 = vld [vmem:[%s3 + $0x10] sm:$0xff]
    %v646 = vld [vmem:[%s3 + $0x18] sm:$0xff]
    %v647 = vld [vmem:[%s3 + $0x20] sm:$0xff]
    %v648 = vld [vmem:[%s3 + $0x28] sm:$0xff]
    %v649 = vld [vmem:[%s3 + $0x30] sm:$0xff]
    %v650 = vld [vmem:[%s3 + $0x38] sm:$0xff]
    %v651 = vld [vmem:[%s3 + $0x40] sm:$0xff]
    %v652 = vld [vmem:[%s3 + $0x48] sm:$0xff]
    %v653 = vld [vmem:[%s3 + $0x50] sm:$0xff]
    %v654 = vld [vmem:[%s3 + $0x58] sm:$0xff]
    %v655 = vld [vmem:[%s3 + $0x60] sm:$0xff]
    %v656 = vld [vmem:[%s3 + $0x68] sm:$0xff]
    %v657 = vld [vmem:[%s3 + $0x70] sm:$0xff]
    %v658 = vld [vmem:[%s3 + $0x78] sm:$0xff]
    %v659 = vld [vmem:[%s4] sm:$0x1]
    %v661 = vperm.slane %v659, 0
    %663 = vmatpush.msra.mxu0 %v658
    %664 = vmatpush.msra.mxu0 %v657
    %665 = vmatpush.msra.mxu0 %v656
    %666 = vmatpush.msra.mxu0 %v655
    %667 = vmatpush.msra.mxu0 %v654
    %668 = vmatpush.msra.mxu0 %v653
    %669 = vmatpush.msra.mxu0 %v652
    %670 = vmatpush.msra.mxu0 %v651
    %671 = vmatpush.msra.mxu0 %v650
    %672 = vmatpush.msra.mxu0 %v649
    %673 = vmatpush.msra.mxu0 %v648
    %674 = vmatpush.msra.mxu0 %v647
    %675 = vmatpush.msra.mxu0 %v646
    %676 = vmatpush.msra.mxu0 %v645
    %677 = vmatpush.msra.mxu0 %v644
    %678 = vmatpush.msra.mxu0 %v643
    %679 = vmatmul.f32.gmra.mxu0 %v642
    %v680 = vpop.f32.mrf.mxu0
    %v681 = vadd.f32 %v661, %v680
    %682 = vdwg.mxu0
    %683 = vst [vmem:[#allocation5] sm:$0x3] %v681
    // Predicated region
    $region26: #{tpu_custom_call.1} parent=1 // pred_check
      _
    $region27: #{tpu_custom_call.1} parent=1 // pred_check_branch
      %685 = sbr.rel (0) target = $region29
    $region28: #{tpu_custom_call.1} parent=1 // pred_region
      %687 = vsyncadd [#allocation4], 0
      %s689 = sshll.u32 [#allocation5], 4
      %s690 = int_to_ptr.vmem [resolvable:$true] %s689
      %s691 = sshll.u32 %s5, 4
      %s692 = int_to_ptr.hbm [resolvable:$true] %s691
      %694 = dma.vmem_to_hbm [thread:$0]  %s690, 32, %s692, [#allocation4]
    $region29: #{tpu_custom_call.1} parent=1 // pred_fallthru
      _
    // Predicated region
    $region30: #{tpu_custom_call.1} parent=1 // pred_check
      _
    $region31: #{tpu_custom_call.1} parent=1 // pred_check_branch
      %696 = sbr.rel (0) target = $region33
    $region32: #{tpu_custom_call.1} parent=1 // pred_region
      %698 = dma.done [#allocation4], 32
    $region33: #{tpu_custom_call.1} parent=1 // pred_fallthru
      _
    %699 = vsyncpa [#allocation3], 1
    %700 = vsyncpa [#allocation4], 1

</llo_original>
